<compile_context>
chip_gen: v7x
topology: tpu7x:2x2x1
jax: 0.10.0
libtpu: 0.0.40
codegen_flags: <defaults>
</compile_context>

<pallas_src>
import functools

import jax
import jax.numpy as jnp
from jax.experimental import pallas as pl
from jax.experimental.pallas import tpu as pltpu


def _tsw_kernel(x_ref, w1_ref, b1_ref, w2_ref, b2_ref, score_ref, prob_ref):
    # x_ref:  (tm, L)  tile of flattened patches (rows = patches)
    # w1_ref: (H, L)   first Linear weight, PyTorch (out, in) layout, f32
    # b1_ref: (H, 1)   first Linear bias as a column (lane-broadcast), f32
    # w2_ref: (H, 1)   second Linear weight as a column, f32
    # b2_ref: (1,)     second Linear bias, SMEM scalar, f32
    x = x_ref[...]
    w1 = w1_ref[...]
    if x.dtype != w1.dtype:
        # Narrow (e.g. bf16) inputs go to the MXU natively; accumulation stays
        # f32 via preferred_element_type and the epilogue stays f32.
        w1 = w1.astype(x.dtype)

    # hT[h, m] = sum_l W1[h, l] * x[m, l]  -> (H, tm); patches live in lanes.
    hT = jax.lax.dot_general(
        w1, x,
        dimension_numbers=(((1,), (1,)), ((), ())),
        preferred_element_type=jnp.float32,
    )
    hT = jnp.maximum(hT + b1_ref[...], 0.0)

    # Second Linear (H -> 1): VPU multiply + sublane reduce (no 1-column MXU op).
    s = jnp.sum(hT * w2_ref[...], axis=0, keepdims=True) + b2_ref[0]   # (1, tm)

    score_ref[...] = s.astype(score_ref.dtype)
    prob_ref[...] = jax.nn.sigmoid(s).astype(prob_ref.dtype)


def _round_up(v, m):
    return ((v + m - 1) // m) * m


def _device_tile_params():
    """Pick (tm_cap, vmem_limit_bytes) per TPU generation.

    v5e / v6e (128 MiB VMEM): tm=32768, scoped limit 64 MiB.
    v7x (64 MiB VMEM) or unknown hardware: tm=16384, scoped limit 32 MiB.
    """
    try:
        vmem_cap = pltpu.get_tpu_info().vmem_capacity_bytes
    except Exception:  # pragma: no cover - query unavailable -> conservative
        vmem_cap = None
    if vmem_cap is not None and vmem_cap > 96 * 1024 * 1024:
        return 32768, 64 * 1024 * 1024
    return 16384, 32 * 1024 * 1024


@functools.partial(jax.jit, static_argnames=("tm_eff", "grid_m", "vmem_limit"))
def _tsw_pallas(x, w1, b1, w2, b2, *, tm_eff, grid_m, vmem_limit):
    B, N, L = x.shape
    H = w1.shape[0]
    M = B * N
    m_pad = grid_m * tm_eff

    x_flat = x.reshape(M, L)
    w1_f = w1.astype(jnp.float32)
    b1_col = b1.reshape(H, 1).astype(jnp.float32)
    w2_col = w2.reshape(H, 1).astype(jnp.float32)
    b2_s = b2.reshape(1).astype(jnp.float32)

    itemsize = jnp.dtype(x.dtype).itemsize
    cost = pl.CostEstimate(
        flops=2 * M * L * H + 2 * M * H,
        transcendentals=M,  # one sigmoid per patch
        bytes_accessed=M * L * itemsize + 2 * M * 4 + (H * L + 2 * H + 1) * 4,
    )

    scores_row, probs_row = pl.pallas_call(
        _tsw_kernel,
        out_shape=(
            jax.ShapeDtypeStruct((1, m_pad), jnp.float32),   # info_scores
            jax.ShapeDtypeStruct((1, m_pad), jnp.float32),   # mask_probs
        ),
        grid_spec=pltpu.PrefetchScalarGridSpec(
            num_scalar_prefetch=0,
            grid=(grid_m,),
            in_specs=[
                pl.BlockSpec((tm_eff, L), lambda i: (i, 0)),          # x rows
                pl.BlockSpec((H, L), lambda i: (0, 0)),               # W1 (const)
                pl.BlockSpec((H, 1), lambda i: (0, 0)),               # b1 (const)
                pl.BlockSpec((H, 1), lambda i: (0, 0)),               # w2 (const)
                pl.BlockSpec(memory_space=pltpu.MemorySpace.SMEM),    # b2 scalar
            ],
            out_specs=(
                pl.BlockSpec((1, tm_eff), lambda i: (0, i)),          # lane-dense
                pl.BlockSpec((1, tm_eff), lambda i: (0, i)),          # lane-dense
            ),
        ),
        compiler_params=pltpu.CompilerParams(
            dimension_semantics=("parallel",),
            vmem_limit_bytes=vmem_limit,
        ),
        cost_estimate=cost,
    )(x_flat, w1_f, b1_col, w2_col, b2_s)

    # Ragged-tail pad columns hold sigmoid(garbage); slice them off here and
    # never consume the raw (1, m_pad) kernel outputs upstream of this slice.
    info_scores = scores_row[0, :M].reshape(B, N)
    mask_probs = probs_row[0, :M].reshape(B, N)
    return mask_probs, info_scores


def time_series_weighting(x, w1, b1, w2, b2, *, tm=None):
    """Forward pass of TimeSeriesWeighting.

    Args:
      x:  (B, N, L) patches (f32 or bf16).
      w1: (H, L) first Linear weight (PyTorch (out, in) layout), H = L // 2.
      b1: (H,)   first Linear bias.
      w2: (1, H) second Linear weight.
      b2: (1,)   second Linear bias.
      tm: optional row-tile override (multiple of 128); default is picked per
          TPU generation (32768 on v5e/v6e, 16384 on v7x).

    Returns:
      (mask_probs (B, N), info_scores (B, N))
    """
    B, N, L = x.shape
    M = B * N
    tm_cap, vmem_limit = _device_tile_params()
    if tm is None:
        tm = tm_cap

    if M <= 256:
        # Tiny problem: one full-array block (M need not be 8/128-aligned
        # because the block spans the whole array).
        tm_eff, grid_m = M, 1
    else:
        assert tm % 128 == 0, "tm must be a multiple of 128"
        # Cap the tile so the grid has >= 2 steps: keeps both TensorCores busy
        # on v7x; on single-TC v5e/v6e the extra ~0.35 us step is negligible.
        tm_eff = min(tm, max(128, _round_up(pl.cdiv(M, 2), 128)))
        grid_m = pl.cdiv(M, tm_eff)

    return _tsw_pallas(x, w1, b1, w2, b2,
                       tm_eff=tm_eff, grid_m=grid_m, vmem_limit=vmem_limit)


def _reference(x, w1, b1, w2, b2):
    B, N, L = x.shape
    xf = x.astype(jnp.float32).reshape(-1, L)
    h = jnp.maximum(xf @ w1.T + b1, 0.0)
    s = (h @ w2.T + b2).reshape(B, N)
    return jax.nn.sigmoid(s), s


if __name__ == "__main__":
    patch_size = 30            # module default
    num_patches = 40           # module default
    hidden = patch_size // 2   # 15
    B = 2

    key = jax.random.PRNGKey(0)
    kx, kw1, kb1, kw2, kb2, kx2 = jax.random.split(key, 6)

    x = jax.random.normal(kx, (B, num_patches, patch_size), dtype=jnp.float32)
    # nn.Linear layouts: weight is (out_features, in_features).
    w1 = jax.random.normal(kw1, (hidden, patch_size), dtype=jnp.float32) * 0.1
    b1 = jax.random.normal(kb1, (hidden,), dtype=jnp.float32) * 0.1
    w2 = jax.random.normal(kw2, (1, hidden), dtype=jnp.float32) * 0.1
    b2 = jax.random.normal(kb2, (1,), dtype=jnp.float32) * 0.1

    # 1) Module-default shapes (M = 80 -> single full-array block).
    mask_probs, info_scores = time_series_weighting(x, w1, b1, w2, b2)
    jax.block_until_ready((mask_probs, info_scores))
    ref_probs, ref_scores = _reference(x, w1, b1, w2, b2)
    assert mask_probs.shape == (B, num_patches)
    assert info_scores.shape == (B, num_patches)
    assert jnp.allclose(info_scores, ref_scores, atol=1e-5, rtol=1e-5)
    assert jnp.allclose(mask_probs, ref_probs, atol=1e-5, rtol=1e-5)

    # 2) Multi-tile + ragged tail with an explicit small tile
    #    (M = 520, tm = 128 -> grid of 5, partial last block).
    x2 = jax.random.normal(kx2, (13, num_patches, patch_size), dtype=jnp.float32)
    mp2, is2 = time_series_weighting(x2, w1, b1, w2, b2, tm=128)
    jax.block_until_ready((mp2, is2))
    rp2, rs2 = _reference(x2, w1, b1, w2, b2)
    assert jnp.allclose(is2, rs2, atol=1e-5, rtol=1e-5)
    assert jnp.allclose(mp2, rp2, atol=1e-5, rtol=1e-5)

    # 3) Auto tile selection + adaptive >=2-step grid path
    #    (M = 520 -> tm_eff = 384, grid of 2, partial tail).
    mp3, is3 = time_series_weighting(x2, w1, b1, w2, b2)
    jax.block_until_ready((mp3, is3))
    assert jnp.allclose(is3, rs2, atol=1e-5, rtol=1e-5)
    assert jnp.allclose(mp3, rp2, atol=1e-5, rtol=1e-5)

    # 4) bf16 input path (halves HBM bytes; bf16 MXU, f32 accumulate/epilogue).
    x_bf16 = x2.astype(jnp.bfloat16)
    mp4, is4 = time_series_weighting(x_bf16, w1, b1, w2, b2)
    jax.block_until_ready((mp4, is4))
    rp4, rs4 = _reference(x_bf16, w1, b1, w2, b2)
    assert jnp.allclose(is4, rs4, atol=3e-2, rtol=3e-2)
    assert jnp.allclose(mp4, rp4, atol=3e-2, rtol=3e-2)

    print("KERNEL_OK")
</pallas_src>

<mosaic_0001>
module attributes {stable_mosaic.version = 11 : i64} {
  func.func @_tsw_kernel(%arg0: i32, %arg1: memref<80x30xf32, #tpu.memory_space<vmem>>, %arg2: memref<15x30xf32, #tpu.memory_space<vmem>>, %arg3: memref<15x1xf32, #tpu.memory_space<vmem>>, %arg4: memref<15x1xf32, #tpu.memory_space<vmem>>, %arg5: memref<1xf32, #tpu.memory_space<smem>>, %arg6: memref<1x80xf32, #tpu.memory_space<vmem>>, %arg7: memref<1x80xf32, #tpu.memory_space<vmem>>) attributes {dimension_semantics = [#tpu.dimension_semantics<parallel>], iteration_bounds = array<i64: 1>, scalar_prefetch = 0 : i64, scratch_operands = 0 : i64, tpu.core_type = #tpu.core_type<tc>, window_params = [{transform_indices = @transform_0, window_bounds = array<i64: 80, 30>}, {pipeline_mode = #tpu.pipeline_mode<synchronous>, transform_indices = @transform_1, window_bounds = array<i64: 15, 30>}, {pipeline_mode = #tpu.pipeline_mode<synchronous>, transform_indices = @transform_2, window_bounds = array<i64: 15, 1>}, {pipeline_mode = #tpu.pipeline_mode<synchronous>, transform_indices = @transform_3, window_bounds = array<i64: 15, 1>}, {transform_indices = @transform_4, window_bounds = array<i64: 1>}, {transform_indices = @transform_5, window_bounds = array<i64: 1, 80>}, {transform_indices = @transform_6, window_bounds = array<i64: 1, 80>}]} {
    %c0 = arith.constant 0 : index
    %c0_0 = arith.constant 0 : index
    %0 = vector.load %arg1[%c0, %c0_0] : memref<80x30xf32, #tpu.memory_space<vmem>>, vector<80x30xf32>
    %c0_1 = arith.constant 0 : index
    %c0_2 = arith.constant 0 : index
    %1 = vector.load %arg2[%c0_1, %c0_2] : memref<15x30xf32, #tpu.memory_space<vmem>>, vector<15x30xf32>
    %cst = arith.constant dense<0.000000e+00> : vector<15x80xf32>
    %2 = tpu.matmul %1, %0, %cst {dimension_numbers = #tpu.dot_dimension_numbers<[1], [1], [0], [0], [0, 0, 1, 0], [], []>} : vector<15x30xf32>, vector<80x30xf32>, vector<15x80xf32> -> vector<15x80xf32>
    %c0_3 = arith.constant 0 : index
    %c0_4 = arith.constant 0 : index
    %3 = vector.load %arg3[%c0_3, %c0_4] : memref<15x1xf32, #tpu.memory_space<vmem>>, vector<15x1xf32>
    %4 = vector.broadcast %3 : vector<15x1xf32> to vector<15x80xf32>
    %5 = arith.addf %2, %4 : vector<15x80xf32>
    %cst_5 = arith.constant 0.000000e+00 : f32
    %6 = vector.broadcast %cst_5 : f32 to vector<15x80xf32>
    %7 = arith.maximumf %5, %6 : vector<15x80xf32>
    %c0_6 = arith.constant 0 : index
    %c0_7 = arith.constant 0 : index
    %8 = vector.load %arg4[%c0_6, %c0_7] : memref<15x1xf32, #tpu.memory_space<vmem>>, vector<15x1xf32>
    %9 = vector.broadcast %8 : vector<15x1xf32> to vector<15x80xf32>
    %10 = arith.mulf %7, %9 : vector<15x80xf32>
    %cst_8 = arith.constant dense<0.000000e+00> : vector<80xf32>
    %11 = vector.multi_reduction <add>, %10, %cst_8 [0] : vector<15x80xf32> to vector<80xf32>
    %12 = vector.shape_cast %11 : vector<80xf32> to vector<1x80xf32>
    %c0_9 = arith.constant 0 : index
    %13 = memref.load %arg5[%c0_9] : memref<1xf32, #tpu.memory_space<smem>>
    %14 = vector.broadcast %13 : f32 to vector<1x80xf32>
    %15 = arith.addf %12, %14 : vector<1x80xf32>
    %c0_10 = arith.constant 0 : index
    %c0_11 = arith.constant 0 : index
    %16 = vector.load %arg6[%c0_10, %c0_11] : memref<1x80xf32, #tpu.memory_space<vmem>>, vector<1x80xf32>
    tpu.vector_store %arg6[%c0_10, %c0_11], %15 {strides = array<i32>} : memref<1x80xf32, #tpu.memory_space<vmem>>, vector<1x80xf32>,
    %17 = arith.negf %15 : vector<1x80xf32>
    %18 = math.exp %17 : vector<1x80xf32>
    %cst_12 = arith.constant 1.000000e+00 : f32
    %19 = vector.broadcast %cst_12 : f32 to vector<1x80xf32>
    %20 = arith.addf %19, %18 : vector<1x80xf32>
    %21 = arith.divf %19, %20 : vector<1x80xf32>
    %c0_13 = arith.constant 0 : index
    %c0_14 = arith.constant 0 : index
    %22 = vector.load %arg7[%c0_13, %c0_14] : memref<1x80xf32, #tpu.memory_space<vmem>>, vector<1x80xf32>
    tpu.vector_store %arg7[%c0_13, %c0_14], %21 {strides = array<i32>} : memref<1x80xf32, #tpu.memory_space<vmem>>, vector<1x80xf32>,
    return
  }
  func.func @transform_0(%arg0: i32) -> (i32, i32) {
    %c0_i32 = arith.constant 0 : i32
    %c0_i32_0 = arith.constant 0 : i32
    return %arg0, %c0_i32 : i32, i32
  }
  func.func @transform_1(%arg0: i32) -> (i32, i32) {
    %c0_i32 = arith.constant 0 : i32
    %c0_i32_0 = arith.constant 0 : i32
    %c0_i32_1 = arith.constant 0 : i32
    return %c0_i32, %c0_i32_0 : i32, i32
  }
  func.func @transform_2(%arg0: i32) -> (i32, i32) {
    %c0_i32 = arith.constant 0 : i32
    %c0_i32_0 = arith.constant 0 : i32
    %c0_i32_1 = arith.constant 0 : i32
    return %c0_i32, %c0_i32_0 : i32, i32
  }
  func.func @transform_3(%arg0: i32) -> (i32, i32) {
    %c0_i32 = arith.constant 0 : i32
    %c0_i32_0 = arith.constant 0 : i32
    %c0_i32_1 = arith.constant 0 : i32
    return %c0_i32, %c0_i32_0 : i32, i32
  }
  func.func @transform_4(%arg0: i32) -> i32 {
    %c0_i32 = arith.constant 0 : i32
    %c0_i32_0 = arith.constant 0 : i32
    return %c0_i32 : i32
  }
  func.func @transform_5(%arg0: i32) -> (i32, i32) {
    %c0_i32 = arith.constant 0 : i32
    %c0_i32_0 = arith.constant 0 : i32
    return %c0_i32, %arg0 : i32, i32
  }
  func.func @transform_6(%arg0: i32) -> (i32, i32) {
    %c0_i32 = arith.constant 0 : i32
    %c0_i32_0 = arith.constant 0 : i32
    return %c0_i32, %arg0 : i32, i32
  }
}

</mosaic_0001>

<llo_original>
// kernel: squeeze.2
$region0: #{squeeze.2}
  %s0 = inlined_call_operand.vmem [shape: f32[80], index: 0, kind: input, shape index: {}]
  %s1 = inlined_call_operand.hbm [shape: f32[2,40], index: 1, kind: output, shape index: {}]
  $region1: #{squeeze.2} parent=0
    #allocation0 [shape = 'u8[1024]{0}', space=vmem, size = 0x400, scoped, tag = 'operand span for operand 1']
    #allocation1 [shape = 's32[1]{0}', space=sflag, size = 0x4, scoped, tag = 'scoped memory for squeeze.2']
    #allocation2 [shape = 'u8[4096]{0}', space=vmem, size = 0x1000, scoped, tag = 'scoped mem for output reshape']
    #allocation3 [shape = 'u8[4096]{0}', space=vmem, size = 0x1000, scoped, tag = 'scoped mem for input reshape']
    %2 = vsyncpa [#allocation1], 0
    %s4 = sshllo.u32 0, 1
    %v5 = vld [vmem:[%s0] sm:%s4]
    %6 = vst [vmem:[#allocation3] sm:%s4] %v5
    %v7 = vld [vmem:[#allocation3] sm:$0x1]
    %vm8 = vcmask 326656
    %9 = vst.msk [vmem:[#allocation2] sm:$0x1] %vm8, %v7
    %v10 = vld [vmem:[#allocation3] sm:$0x1]
    %11 = vrot.lane.b32.xlu0 %v10, 88
    %v12 = vpop.permute.xlu0 %11
    %vm13 = vcmask 326656
    %s14 = scalar_lea.vmem [#allocation2], 1
    %15 = vst.msk [vmem:[%s14] sm:$0x1] %vm13, %v12
    %s17 = sshllo.u32 0, 2
    %v19 = vld [vmem:[#allocation2] sm:%s17]
    %s20 = sshllo.u32 0, 2
    %21 = vst [vmem:[#allocation0] sm:%s20] %v19
    %s23 = ssub.s32 32, 32
    %24 = vsyncadd [#allocation1], %s23
    %s26 = sshll.u32 [#allocation0], 4
    %s27 = int_to_ptr.vmem [resolvable:$true] %s26
    %29 = dma.vmem_to_hbm [thread:$0]  %s27, 32, %s1, [#allocation1]
    %30 = dma.done [#allocation1], 32
    %31 = vsyncpa [#allocation1], 1

// kernel: _tsw_pallas.1
$region0: #{_tsw_pallas.1}
  #allocation0 [shape = 'u32[]', space=smem, size = 0x4, offset = 0x4, fixed_abs, tag = 'smem constant byte address 0x4 - core index']
  #allocation1 [shape = 'u32[144,128]{1,0:T(1,128)}', space=vmem, size = 0x12000, scoped, tag = 'internal scratch']
  #allocation2 [shape = 'f32[1]{0:T(128)S(6)}', space=smem, size = 0x200, scoped, tag = 'scoped memory for _tsw_pallas.1']
  %s0 = inlined_call_operand.vmem [shape: f32[80,30], index: 0, kind: input, shape index: {}]
  %s1 = inlined_call_operand.vmem [shape: f32[15,30], index: 1, kind: input, shape index: {}]
  %s2 = inlined_call_operand.vmem [shape: f32[15,1], index: 2, kind: input, shape index: {}]
  %s3 = inlined_call_operand.vmem [shape: f32[15,1], index: 3, kind: input, shape index: {}]
  %s4 = inlined_call_operand.<no memory space> [shape: f32[1], index: 4, kind: input, shape index: {}]
  %s5 = inlined_call_operand.vmem [shape: f32[1,80], index: 5, kind: output, shape index: {0}]
  %s6 = inlined_call_operand.vmem [shape: f32[1,80], index: 6, kind: output, shape index: {1}]
  %7 = xla_tuple %s5, %s6
  %s8 = sld [smem:[#allocation0]]
  $region38: #{_tsw_pallas.1} parent=0
    _
  %s10 = ssub.s32 1, %s8
  %s11 = scalar_select 0, %s10, %s8
  %12 = sst [smem:[#allocation2]] %s4
  // Predicated region
  $region2: #{_tsw_pallas.1} parent=0 // pred_check
    _
  $region3: #{_tsw_pallas.1} parent=0 // pred_check_branch
    %14 = sbr.rel (0) target = $region5
  $region4: #{_tsw_pallas.1} parent=0 // pred_region
    _
  $region5: #{_tsw_pallas.1} parent=0 // pred_fallthru
    _
  // Predicated region
  $region6: #{_tsw_pallas.1} parent=0 // pred_check
    _
  $region7: #{_tsw_pallas.1} parent=0 // pred_check_branch
    %16 = sbr.rel (0) target = $region9
  $region8: #{_tsw_pallas.1} parent=0 // pred_region
    _
  $region9: #{_tsw_pallas.1} parent=0 // pred_fallthru
    _
  // Predicated region
  $region10: #{_tsw_pallas.1} parent=0 // pred_check
    _
  $region11: #{_tsw_pallas.1} parent=0 // pred_check_branch
    %18 = sbr.rel (0) target = $region13
  $region12: #{_tsw_pallas.1} parent=0 // pred_region
    _
  $region13: #{_tsw_pallas.1} parent=0 // pred_fallthru
    _
  // Predicated region
  $region14: #{_tsw_pallas.1} parent=0 // pred_check
    _
  $region15: #{_tsw_pallas.1} parent=0 // pred_check_branch
    %20 = sbr.rel (0) target = $region17
  $region16: #{_tsw_pallas.1} parent=0 // pred_region
    _
  $region17: #{_tsw_pallas.1} parent=0 // pred_fallthru
    _
  // Predicated region
  $region18: #{_tsw_pallas.1} parent=0 // pred_check
    _
  $region19: #{_tsw_pallas.1} parent=0 // pred_check_branch
    %22 = sbr.rel (0) target = $region21
  $region20: #{_tsw_pallas.1} parent=0 // pred_region
    _
  $region21: #{_tsw_pallas.1} parent=0 // pred_fallthru
    _
  %v23 = vld [vmem:[%s0] sm:$0xff]
  %v24 = vld [vmem:[%s0 + $0x8] sm:$0xff]
  %v25 = vld [vmem:[%s0 + $0x10] sm:$0xff]
  %v26 = vld [vmem:[%s0 + $0x18] sm:$0xff]
  %v27 = vld [vmem:[%s0 + $0x20] sm:$0xff]
  %v28 = vld [vmem:[%s0 + $0x28] sm:$0xff]
  %v29 = vld [vmem:[%s0 + $0x30] sm:$0xff]
  %v30 = vld [vmem:[%s0 + $0x38] sm:$0xff]
  %v31 = vld [vmem:[%s0 + $0x40] sm:$0xff]
  %v32 = vld [vmem:[%s0 + $0x48] sm:$0xff]
  %v33 = vld [vmem:[%s1] sm:$0xff]
  %v34 = vld [vmem:[%s1 + $0x8] sm:$0x7f]
  %v35 = vld [vmem:[%s2] sm:$0xff]
  %v36 = vld [vmem:[%s2 + $0x8] sm:$0x7f]
  %38 = vset.pattern.permute.xlu0 0
  %39 = vperm.xlu0 %38, %v35
  %v40 = vpop.permute.xlu0 %39
  %43 = vset.pattern.permute.xlu0 0
  %44 = vperm.xlu0 %43, %v36
  %v45 = vpop.permute.xlu0 %44
  %vm47 = vcmask 244736
  %v49 = vsel %vm47, %v33, 0
  %v52 = vsel %vm47, %v34, 0
  %v55 = vsel %vm47, %v23, 0
  %v58 = vsel %vm47, %v24, 0
  %v61 = vsel %vm47, %v25, 0
  %v64 = vsel %vm47, %v26, 0
  %v67 = vsel %vm47, %v27, 0
  %v70 = vsel %vm47, %v28, 0
  %v73 = vsel %vm47, %v29, 0
  %v76 = vsel %vm47, %v30, 0
  %v79 = vsel %vm47, %v31, 0
  %v82 = vsel %vm47, %v32, 0
  %84 = vmatprep.subr.mxu0 0.0
  %85 = vmatpush1.xpose.msra.mxu0 %v55
  %86 = vmatprep.subr.mxu0 0.0
  %87 = vmatpush1.xpose.msra.mxu0 %v58
  %88 = vmatprep.subr.mxu0 0.0
  %89 = vmatpush1.xpose.msra.mxu0 %v61
  %90 = vmatprep.subr.mxu0 0.0
  %91 = vmatpush1.xpose.msra.mxu0 %v64
  %92 = vmatprep.subr.mxu0 0.0
  %93 = vmatpush1.xpose.msra.mxu0 %v67
  %94 = vmatprep.subr.mxu0 0.0
  %95 = vmatpush1.xpose.msra.mxu0 %v70
  %96 = vmatprep.subr.mxu0 0.0
  %97 = vmatpush1.xpose.msra.mxu0 %v73
  %98 = vmatprep.subr.mxu0 0.0
  %99 = vmatpush1.xpose.msra.mxu0 %v76
  %100 = vmatprep.subr.mxu0 0.0
  %101 = vmatpush1.xpose.msra.mxu0 %v79
  %102 = vmatprep.subr.mxu0 0.0
  %103 = vmatpush1.xpose.msra.mxu0 %v82
  %104 = vmatprep.subr.mxu0 0.0
  %105 = vmatpush1.xpose.msra.mxu0 0.0
  %106 = vmatprep.subr.mxu0 0.0
  %107 = vmatpush1.xpose.msra.mxu0 0.0
  %108 = vmatprep.subr.mxu0 0.0
  %109 = vmatpush1.xpose.msra.mxu0 0.0
  %110 = vmatprep.subr.mxu0 0.0
  %111 = vmatpush1.xpose.msra.mxu0 0.0
  %112 = vmatprep.subr.mxu0 0.0
  %113 = vmatpush1.xpose.msra.mxu0 0.0
  %114 = vmatprep.subr.mxu0 0.0
  %115 = vmatpush1.xpose.msra.mxu0 0.0
  %116 = vmatprep.subr.mxu0 0.0
  %117 = vmatpush1.xpose.msra.mxu0 0.0
  %118 = vmatprep.subr.mxu0 0.0
  %119 = vmatpush1.xpose.msra.mxu0 0.0
  %120 = vmatprep.subr.mxu0 0.0
  %121 = vmatpush1.xpose.msra.mxu0 0.0
  %122 = vmatprep.subr.mxu0 0.0
  %123 = vmatpush1.xpose.msra.mxu0 0.0
  %124 = vmatprep.subr.mxu0 0.0
  %125 = vmatpush1.xpose.msra.mxu0 0.0
  %126 = vmatprep.subr.mxu0 0.0
  %127 = vmatpush1.xpose.msra.mxu0 0.0
  %128 = vmatprep.subr.mxu0 0.0
  %129 = vmatpush1.xpose.msra.mxu0 0.0
  %130 = vmatprep.subr.mxu0 0.0
  %131 = vmatpush1.xpose.msra.mxu0 0.0
  %132 = vmatprep.subr.mxu0 0.0
  %133 = vmatpush1.xpose.msra.mxu0 0.0
  %134 = vmatprep.subr.mxu0 0.0
  %135 = vmatpush1.xpose.msra.mxu0 0.0
  %136 = vmatprep.subr.mxu0 0.0
  %137 = vmatpush1.xpose.msra.mxu0 0.0
  %138 = vmatprep.subr.mxu0 0.0
  %139 = vmatpush1.xpose.msra.mxu0 0.0
  %140 = vmatprep.subr.mxu0 0.0
  %141 = vmatpush1.xpose.msra.mxu0 0.0
  %142 = vmatprep.subr.mxu0 0.0
  %143 = vmatpush1.xpose.msra.mxu0 0.0
  %144 = vmatprep.subr.mxu0 0.0
  %145 = vmatpush1.xpose.msra.mxu0 0.0
  %146 = vmatprep.subr.mxu0 0.0
  %147 = vmatpush1.xpose.msra.mxu0 0.0
  %148 = vmatprep.mubr.f32.mxu0 0.0
  %149 = vmatmul.mubr.f32.gmra.mrb[0].mxu0 %v49
  %v150 = vpop.f32.mrb[0].mxu0
  %v151 = vadd.f32 %v40, %v150
  %v152 = vpop.f32.mrb[0].mxu0
  %153 = vmatprep.mubr.f32.mxu0 0.0
  %154 = vmatmul.mubr.f32.gmra.mrb[0].mxu0 %v52
  %v155 = vpop.f32.mrb[0].mxu0
  %v156 = vadd.f32 %v45, %v155
  %v157 = vpop.f32.mrb[0].mxu0
  %158 = vdwg.mxu0
  %v159 = vmax.f32 %v151, 0.0
  %v160 = vmax.f32 %v156, 0.0
  %v161 = vld [vmem:[%s3] sm:$0xff]
  %v162 = vld [vmem:[%s3 + $0x8] sm:$0x7f]
  %164 = vset.pattern.permute.xlu0 0
  %165 = vperm.xlu0 %164, %v161
  %v166 = vpop.permute.xlu0 %165
  %169 = vset.pattern.permute.xlu0 0
  %170 = vperm.xlu0 %169, %v162
  %v171 = vpop.permute.xlu0 %170
  %v173 = vmul.f32 %v159, %v166
  %v174 = vmul.f32 %v160, %v171
  %vm175 = vcmask 654336
  %v176 = vsel %vm175, %v173, 0.0
  %vm177 = vcmask 653312
  %v178 = vsel %vm177, %v174, 0.0
  %v179 = vadd.f32 %v176, %v178
  %v180 = vrot.slane %v179, 4
  %v181 = vadd.f32 %v179, %v180
  %v182 = vrot.slane %v181, 2
  %v183 = vadd.f32 %v181, %v182
  %v184 = vrot.slane %v183, 1
  %v185 = vadd.f32 %v183, %v184
  %s186 = sld [smem:[#allocation2]]
  %v187 = vstv %s186
  %v188 = vadd.f32 %v185, %v187
  %vm189 = vcmask 647168
  %190 = vst.msk [vmem:[%s5] sm:$0x1] %vm189, %v188
  %v191 = vxor.u32 %v188, 2147483648
  %v192 = vmul.f32 %v191, 1.442695
  %v193 = vpow.pop %v192
  %v194 = vadd.f32 %v193, 1.0
  %v195 = vrcp.pop %v194
  %v196 = vmul.f32 1.0, %v195
  %197 = vst.msk [vmem:[%s6] sm:$0x1] %vm189, %v196
  // Predicated region
  $region22: #{_tsw_pallas.1} parent=0 // pred_check
    _
  $region23: #{_tsw_pallas.1} parent=0 // pred_check_branch
    %199 = sbr.rel (0) target = $region25
  $region24: #{_tsw_pallas.1} parent=0 // pred_region
    _
  $region25: #{_tsw_pallas.1} parent=0 // pred_fallthru
    _
  // Predicated region
  $region26: #{_tsw_pallas.1} parent=0 // pred_check
    _
  $region27: #{_tsw_pallas.1} parent=0 // pred_check_branch
    %201 = sbr.rel (0) target = $region29
  $region28: #{_tsw_pallas.1} parent=0 // pred_region
    _
  $region29: #{_tsw_pallas.1} parent=0 // pred_fallthru
    _
  // Predicated region
  $region30: #{_tsw_pallas.1} parent=0 // pred_check
    _
  $region31: #{_tsw_pallas.1} parent=0 // pred_check_branch
    %203 = sbr.rel (0) target = $region33
  $region32: #{_tsw_pallas.1} parent=0 // pred_region
    _
  $region33: #{_tsw_pallas.1} parent=0 // pred_fallthru
    _
  // Predicated region
  $region34: #{_tsw_pallas.1} parent=0 // pred_check
    _
  $region35: #{_tsw_pallas.1} parent=0 // pred_check_branch
    %205 = sbr.rel (0) target = $region37
  $region36: #{_tsw_pallas.1} parent=0 // pred_region
    _
  $region37: #{_tsw_pallas.1} parent=0 // pred_fallthru
    _

</llo_original>
